<compile_context>
chip_gen: v7x
topology: tpu7x:2x2x1
jax: 0.10.0
libtpu: 0.0.40
codegen_flags: <defaults>
</compile_context>

<pallas_src>
import functools

import jax
import jax.numpy as jnp
import numpy as np
from jax.experimental import pallas as pl
from jax.experimental.pallas import tpu as pltpu

LN_EPS = 1e-6  # timm ViT / DeiT uses LayerNorm(eps=1e-6)
VMEM_LIMIT = 48 * 1024 * 1024  # leaves headroom on v7x's 64 MiB/TC; ample on v5e/v6e


# ----------------------------- shared math --------------------------------
def _layernorm(x, w, b):
    mu = jnp.mean(x, axis=-1, keepdims=True)
    xc = x - mu
    var = jnp.mean(xc * xc, axis=-1, keepdims=True)
    inv = jax.lax.rsqrt(var + LN_EPS)
    return xc * inv * w + b


def _gelu(x):
    # TODO(synk): timm's DeiT uses exact erf-GELU; tanh approximation used here
    # for guaranteed Mosaic lowering (max abs diff ~1e-3 vs erf).
    return jax.nn.gelu(x, approximate=True)


def _round_up(x, m):
    return (x + m - 1) // m * m


# ------------------- patch-embed / generic matmul kernel ------------------
def matmul_bias_kernel(x_ref, w_ref, b_ref, o_ref):
    o_ref[...] = (
        jnp.dot(x_ref[...], w_ref[...], preferred_element_type=jnp.float32)
        + b_ref[...]
    )


def matmul_bias(x_bf16, w_bf16, b2d, *, bm=256):
    m, k = x_bf16.shape
    n = w_bf16.shape[1]
    if m <= 8:
        bm = m
    else:
        bm = min(bm, m)
        if bm % 8 != 0:
            bm = (bm // 8) * 8        # round down to a sublane multiple
    return pl.pallas_call(
        matmul_bias_kernel,
        out_shape=jax.ShapeDtypeStruct((m, n), jnp.float32),
        grid=(pl.cdiv(m, bm),),
        in_specs=[
            pl.BlockSpec((bm, k), lambda i: (i, 0)),
            pl.BlockSpec((k, n), lambda i: (0, 0)),
            pl.BlockSpec((1, n), lambda i: (0, 0)),
        ],
        out_specs=pl.BlockSpec((bm, n), lambda i: (i, 0)),
        compiler_params=pltpu.CompilerParams(
            dimension_semantics=("parallel",),
            vmem_limit_bytes=VMEM_LIMIT),
    )(x_bf16, w_bf16, b2d)


# ---------------------- attention half of a block -------------------------
def attn_kernel(x_ref, ln1w_ref, ln1b_ref, qkvw_ref, qkvb_ref,
                projw_ref, projb_ref, o_ref, *, num_heads, t_valid):
    x = x_ref[0]                                  # (T_pad, D) f32 residual
    T, D = x.shape
    hd = D // num_heads
    scale = float(hd) ** -0.5

    h = _layernorm(x, ln1w_ref[...], ln1b_ref[...])
    qkv = jnp.dot(h.astype(jnp.bfloat16), qkvw_ref[...],
                  preferred_element_type=jnp.float32) + qkvb_ref[...]
    q = qkv[:, 0:D] * scale
    k = qkv[:, D:2 * D]
    v = qkv[:, 2 * D:3 * D]
    # TODO(synk): replace the per-head lane-slice stack/concat with a single
    # reshape/einshape relayout once minor-dim-splitting reshapes are
    # guaranteed to lower; kept as slices here for Mosaic-lowering safety.
    qh = jnp.stack([q[:, i * hd:(i + 1) * hd] for i in range(num_heads)],
                   axis=0).astype(jnp.bfloat16)   # (H, T, hd)
    kh = jnp.stack([k[:, i * hd:(i + 1) * hd] for i in range(num_heads)],
                   axis=0).astype(jnp.bfloat16)
    vh = jnp.stack([v[:, i * hd:(i + 1) * hd] for i in range(num_heads)],
                   axis=0).astype(jnp.bfloat16)
    s = jnp.einsum('hqd,hkd->hqk', qh, kh,
                   preferred_element_type=jnp.float32)          # (H, T, T) f32
    if t_valid < T:
        # broadcast (1, 1, T) key mask — only varies along the key axis
        key_idx = jax.lax.broadcasted_iota(jnp.int32, (1, 1, T), 2)
        s = jnp.where(key_idx < t_valid, s, -1e30)
    s = s - jnp.max(s, axis=-1, keepdims=True)
    p = jnp.exp(s)
    p = p * pl.reciprocal(jnp.sum(p, axis=-1, keepdims=True), approx=True)
    ctx = jnp.einsum('hqk,hkd->hqd', p.astype(jnp.bfloat16), vh,
                     preferred_element_type=jnp.float32)         # (H, T, hd)
    attn = jnp.concatenate([ctx[i] for i in range(num_heads)], axis=-1)  # (T, D)
    attn = (jnp.dot(attn.astype(jnp.bfloat16), projw_ref[...],
                    preferred_element_type=jnp.float32) + projb_ref[...])
    o_ref[0] = x + attn


# ------------------------ MLP half of a block ------------------------------
def mlp_kernel(x_ref, ln2w_ref, ln2b_ref, fc1w_ref, fc1b_ref,
               fc2w_ref, fc2b_ref, o_ref):
    x = x_ref[0]                                  # (T_pad, D) f32 residual
    h = _layernorm(x, ln2w_ref[...], ln2b_ref[...])
    m = jnp.dot(h.astype(jnp.bfloat16), fc1w_ref[...],
                preferred_element_type=jnp.float32) + fc1b_ref[...]
    m = _gelu(m)
    m = jnp.dot(m.astype(jnp.bfloat16), fc2w_ref[...],
                preferred_element_type=jnp.float32) + fc2b_ref[...]
    o_ref[0] = x + m


def _const_full_spec(a):
    nd = a.ndim
    return pl.BlockSpec(a.shape, lambda b, _nd=nd: (0,) * _nd)


def transformer_block(x, p, num_heads, t_valid):
    B, T, D = x.shape
    x_spec = pl.BlockSpec((1, T, D), lambda b: (b, 0, 0))
    cp = pltpu.CompilerParams(dimension_semantics=("parallel",),
                              vmem_limit_bytes=VMEM_LIMIT)

    # attention half
    attn_w = [p["ln1_w"], p["ln1_b"], p["qkv_w"], p["qkv_b"],
              p["proj_w"], p["proj_b"]]
    x = pl.pallas_call(
        functools.partial(attn_kernel, num_heads=num_heads, t_valid=t_valid),
        out_shape=jax.ShapeDtypeStruct((B, T, D), jnp.float32),
        grid=(B,),
        in_specs=[x_spec] + [_const_full_spec(w) for w in attn_w],
        out_specs=x_spec,
        compiler_params=cp,
    )(x, *attn_w)

    # MLP half
    mlp_w = [p["ln2_w"], p["ln2_b"], p["fc1_w"], p["fc1_b"],
             p["fc2_w"], p["fc2_b"]]
    x = pl.pallas_call(
        mlp_kernel,
        out_shape=jax.ShapeDtypeStruct((B, T, D), jnp.float32),
        grid=(B,),
        in_specs=[x_spec] + [_const_full_spec(w) for w in mlp_w],
        out_specs=x_spec,
        compiler_params=cp,
    )(x, *mlp_w)
    return x


# ----------------------- final LayerNorm + head kernel --------------------
def head_kernel(cls_ref, lnw_ref, lnb_ref, hw_ref, hb_ref, o_ref):
    h = _layernorm(cls_ref[...], lnw_ref[...], lnb_ref[...])    # (B, D) f32
    o_ref[...] = (jnp.dot(h.astype(jnp.bfloat16), hw_ref[...],
                          preferred_element_type=jnp.float32) + hb_ref[...])


def final_head(cls_tok, lnw, lnb, hw, hb):
    # One lane-dense (B, D) @ (D, nc_pad) matmul; pad classes to a multiple of
    # 128 for an unmasked output store, then slice the real classes.
    B, _ = cls_tok.shape
    nc = hw.shape[1]
    ncp = _round_up(nc, 128)
    if ncp != nc:
        hw = jnp.pad(hw, ((0, 0), (0, ncp - nc)))
        hb = jnp.pad(hb, ((0, 0), (0, ncp - nc)))
    out = pl.pallas_call(
        head_kernel,
        out_shape=jax.ShapeDtypeStruct((B, ncp), jnp.float32),
        compiler_params=pltpu.CompilerParams(vmem_limit_bytes=VMEM_LIMIT),
    )(cls_tok, lnw, lnb, hw, hb)
    return out[:, :nc]


# ------------------------------ params ------------------------------------
def init_params(key, *, in_ch, img, patch, dim, depth, heads, mlp_ratio, num_classes):
    del heads  # head count is a forward-time config, no params
    n_patch = (img // patch) ** 2
    seq = n_patch + 1
    hidden = dim * mlp_ratio

    def normal(k, shape, scale=0.02, dtype=jnp.float32):
        return (scale * jax.random.normal(k, shape)).astype(dtype)

    bf16 = jnp.bfloat16
    keys = jax.random.split(key, 6 + depth)
    params = {
        # patch-embed conv stored pre-flattened as (C*P*P, D) matmul weight
        "pe_w": normal(keys[0], (in_ch * patch * patch, dim), dtype=bf16),
        "pe_b": jnp.zeros((1, dim), jnp.float32),
        "cls_token": normal(keys[1], (1, 1, dim)),
        "pos_embed": normal(keys[2], (1, seq, dim)),
        "norm_w": jnp.ones((1, dim), jnp.float32),
        "norm_b": jnp.zeros((1, dim), jnp.float32),
        "head_w": normal(keys[3], (dim, num_classes), dtype=bf16),
        "head_b": jnp.zeros((1, num_classes), jnp.float32),
        "blocks": [],
    }
    for d in range(depth):
        bk = jax.random.split(keys[6 + d], 4)
        params["blocks"].append({
            "ln1_w": jnp.ones((1, dim), jnp.float32),
            "ln1_b": jnp.zeros((1, dim), jnp.float32),
            "qkv_w": normal(bk[0], (dim, 3 * dim), dtype=bf16),
            "qkv_b": jnp.zeros((1, 3 * dim), jnp.float32),
            "proj_w": normal(bk[1], (dim, dim), dtype=bf16),
            "proj_b": jnp.zeros((1, dim), jnp.float32),
            "ln2_w": jnp.ones((1, dim), jnp.float32),
            "ln2_b": jnp.zeros((1, dim), jnp.float32),
            "fc1_w": normal(bk[2], (dim, hidden), dtype=bf16),
            "fc1_b": jnp.zeros((1, hidden), jnp.float32),
            "fc2_w": normal(bk[3], (hidden, dim), dtype=bf16),
            "fc2_b": jnp.zeros((1, dim), jnp.float32),
        })
    return params


# ------------------------------ forward ------------------------------------
def patchify(x_nchw, patch):
    B, C, H, W = x_nchw.shape
    hp, wp = H // patch, W // patch
    xp = x_nchw.reshape(B, C, hp, patch, wp, patch)
    xp = xp.transpose(0, 2, 4, 1, 3, 5)           # (B, hp, wp, C, P, P)
    return xp.reshape(B * hp * wp, C * patch * patch), hp * wp


def deit_forward(x_nchw, params, *, patch, heads):
    B = x_nchw.shape[0]
    dim = params["pe_w"].shape[1]
    assert dim % heads == 0 and (dim // heads) % 8 == 0
    xp, n_patch = patchify(x_nchw, patch)
    tokens = matmul_bias(xp.astype(jnp.bfloat16), params["pe_w"],
                         params["pe_b"]).reshape(B, n_patch, dim)
    cls = jnp.broadcast_to(params["cls_token"], (B, 1, dim))
    x = jnp.concatenate([cls, tokens], axis=1) + params["pos_embed"]
    T = n_patch + 1
    # pad the sequence to a lane multiple (197 -> 256 at deit_base scale);
    # padded key columns are masked inside the attention kernel and padded
    # rows never reach the classifier head.
    T_pad = _round_up(T, 128)
    if T_pad != T:
        x = jnp.pad(x, ((0, 0), (0, T_pad - T), (0, 0)))
    # TODO(synk): hide per-block weight streaming behind compute via cross-call
    # weight prefetch (P10); each block call currently exposes its weight DMA.
    for blk in params["blocks"]:
        x = transformer_block(x, blk, heads, t_valid=T)
    cls_tok = x[:, 0, :]                          # (B, D): only cls rows feed the head
    return final_head(cls_tok, params["norm_w"], params["norm_b"],
                      params["head_w"], params["head_b"])


# --------------------------- pure-JAX reference ----------------------------
def ref_forward(x_nchw, params, *, patch, heads):
    f32 = lambda a: a.astype(jnp.float32)
    B = x_nchw.shape[0]
    dim = params["pe_w"].shape[1]
    xp, n_patch = patchify(x_nchw, patch)
    tokens = (xp @ f32(params["pe_w"]) + params["pe_b"]).reshape(B, n_patch, dim)
    cls = jnp.broadcast_to(params["cls_token"], (B, 1, dim))
    x = jnp.concatenate([cls, tokens], axis=1) + params["pos_embed"]
    hd = dim // heads
    scale = float(hd) ** -0.5
    for p in params["blocks"]:
        h = _layernorm(x, p["ln1_w"], p["ln1_b"])
        qkv = h @ f32(p["qkv_w"]) + p["qkv_b"]                 # (B, T, 3D)
        q, k, v = qkv[..., :dim], qkv[..., dim:2 * dim], qkv[..., 2 * dim:]
        T = x.shape[1]
        q = q.reshape(B, T, heads, hd).transpose(0, 2, 1, 3)
        k = k.reshape(B, T, heads, hd).transpose(0, 2, 1, 3)
        v = v.reshape(B, T, heads, hd).transpose(0, 2, 1, 3)
        s = jnp.einsum("bhtd,bhsd->bhts", q, k) * scale
        pattn = jax.nn.softmax(s, axis=-1)
        a = jnp.einsum("bhts,bhsd->bhtd", pattn, v).transpose(0, 2, 1, 3).reshape(B, T, dim)
        x = x + (a @ f32(p["proj_w"]) + p["proj_b"])
        h2 = _layernorm(x, p["ln2_w"], p["ln2_b"])
        m = _gelu(h2 @ f32(p["fc1_w"]) + p["fc1_b"]) @ f32(p["fc2_w"]) + p["fc2_b"]
        x = x + m
    cls_tok = _layernorm(x, params["norm_w"], params["norm_b"])[:, 0, :]
    return cls_tok @ f32(params["head_w"]) + params["head_b"]


# --------------------------------- main ------------------------------------
if __name__ == "__main__":
    # tiny DeiT config (deit_base is C=3, img=224, patch=16, D=768, depth=12, H=12)
    B, C, IMG, PATCH = 2, 3, 16, 8
    DIM, DEPTH, HEADS, MLP_RATIO, NUM_CLASSES = 32, 2, 4, 4, 10

    key = jax.random.PRNGKey(0)
    pkey, xkey = jax.random.split(key)
    params = init_params(pkey, in_ch=C, img=IMG, patch=PATCH, dim=DIM,
                         depth=DEPTH, heads=HEADS, mlp_ratio=MLP_RATIO,
                         num_classes=NUM_CLASSES)
    x = jax.random.normal(xkey, (B, C, IMG, IMG), dtype=jnp.float32)  # NCHW

    out = deit_forward(x, params, patch=PATCH, heads=HEADS)
    out = jax.block_until_ready(out)
    assert out.shape == (B, NUM_CLASSES), out.shape

    ref = jax.block_until_ready(ref_forward(x, params, patch=PATCH, heads=HEADS))
    np.testing.assert_allclose(np.asarray(out), np.asarray(ref),
                               rtol=2e-2, atol=2e-2)
    print("KERNEL_OK")
</pallas_src>

<mosaic_0001>
module attributes {stable_mosaic.version = 11 : i64} {
  func.func @matmul_bias_kernel(%arg0: i32, %arg1: memref<8x192xbf16, #tpu.memory_space<vmem>>, %arg2: memref<192x32xbf16, #tpu.memory_space<vmem>>, %arg3: memref<1x32xf32, #tpu.memory_space<vmem>>, %arg4: memref<8x32xf32, #tpu.memory_space<vmem>>) attributes {dimension_semantics = [#tpu.dimension_semantics<parallel>], iteration_bounds = array<i64: 1>, scalar_prefetch = 0 : i64, scratch_operands = 0 : i64, tpu.core_type = #tpu.core_type<tc>, window_params = [{transform_indices = @transform_0, window_bounds = array<i64: 8, 192>}, {pipeline_mode = #tpu.pipeline_mode<synchronous>, transform_indices = @transform_1, window_bounds = array<i64: 192, 32>}, {pipeline_mode = #tpu.pipeline_mode<synchronous>, transform_indices = @transform_2, window_bounds = array<i64: 1, 32>}, {transform_indices = @transform_3, window_bounds = array<i64: 8, 32>}]} {
    %c0 = arith.constant 0 : index
    %c0_0 = arith.constant 0 : index
    %0 = vector.load %arg1[%c0, %c0_0] : memref<8x192xbf16, #tpu.memory_space<vmem>>, vector<8x192xbf16>
    %c0_1 = arith.constant 0 : index
    %c0_2 = arith.constant 0 : index
    %1 = vector.load %arg2[%c0_1, %c0_2] : memref<192x32xbf16, #tpu.memory_space<vmem>>, vector<192x32xbf16>
    %cst = arith.constant dense<0.000000e+00> : vector<8x32xf32>
    %2 = tpu.matmul %0, %1, %cst {dimension_numbers = #tpu.dot_dimension_numbers<[1], [0], [0], [1], [0, 0, 1, 1], [], []>} : vector<8x192xbf16>, vector<192x32xbf16>, vector<8x32xf32> -> vector<8x32xf32>
    %c0_3 = arith.constant 0 : index
    %c0_4 = arith.constant 0 : index
    %3 = vector.load %arg3[%c0_3, %c0_4] : memref<1x32xf32, #tpu.memory_space<vmem>>, vector<1x32xf32>
    %4 = vector.broadcast %3 : vector<1x32xf32> to vector<8x32xf32>
    %5 = arith.addf %2, %4 : vector<8x32xf32>
    %c0_5 = arith.constant 0 : index
    %c0_6 = arith.constant 0 : index
    %6 = vector.load %arg4[%c0_5, %c0_6] : memref<8x32xf32, #tpu.memory_space<vmem>>, vector<8x32xf32>
    tpu.vector_store %arg4[%c0_5, %c0_6], %5 {strides = array<i32>} : memref<8x32xf32, #tpu.memory_space<vmem>>, vector<8x32xf32>,
    return
  }
  func.func @transform_0(%arg0: i32) -> (i32, i32) {
    %c0_i32 = arith.constant 0 : i32
    %c0_i32_0 = arith.constant 0 : i32
    return %arg0, %c0_i32 : i32, i32
  }
  func.func @transform_1(%arg0: i32) -> (i32, i32) {
    %c0_i32 = arith.constant 0 : i32
    %c0_i32_0 = arith.constant 0 : i32
    %c0_i32_1 = arith.constant 0 : i32
    return %c0_i32, %c0_i32_0 : i32, i32
  }
  func.func @transform_2(%arg0: i32) -> (i32, i32) {
    %c0_i32 = arith.constant 0 : i32
    %c0_i32_0 = arith.constant 0 : i32
    %c0_i32_1 = arith.constant 0 : i32
    return %c0_i32, %c0_i32_0 : i32, i32
  }
  func.func @transform_3(%arg0: i32) -> (i32, i32) {
    %c0_i32 = arith.constant 0 : i32
    %c0_i32_0 = arith.constant 0 : i32
    return %arg0, %c0_i32 : i32, i32
  }
}

</mosaic_0001>

<llo_original>
// kernel: tpu_custom_call.1
$region0: #{tpu_custom_call.1}
  #allocation0 [shape = 'u32[]', space=smem, size = 0x4, offset = 0x4, fixed_abs, tag = 'smem constant byte address 0x4 - core index']
  #allocation1 [shape = 'u32[144,128]{1,0:T(1,128)}', space=vmem, size = 0x12000, scoped, tag = 'internal scratch']
  %s0 = inlined_call_operand.vmem [shape: bf16[8,192], index: 0, kind: input, shape index: {}]
  %s1 = inlined_call_operand.vmem [shape: bf16[192,32], index: 1, kind: input, shape index: {}]
  %s2 = inlined_call_operand.vmem [shape: f32[1,32], index: 2, kind: input, shape index: {}]
  %s3 = inlined_call_operand.hbm [shape: f32[8,32], index: 3, kind: output, shape index: {}]
  %s4 = sld [smem:[#allocation0]]
  $region22: #{tpu_custom_call.1} parent=0
    _
  %s6 = ssub.s32 1, %s4
  %s7 = scalar_select 0, %s6, %s4
  $region1: #{tpu_custom_call.1} parent=0
    #allocation2 [shape = 'u8[4096]{0}', space=vmem, size = 0x1000, scoped, tag = 'output window, operand 0, single buffered']
    #allocation3 [shape = 's32[1]{0}', space=sflag, size = 0x4, scoped, tag = 'scoped memory for tpu_custom_call.1']
    %8 = vsyncpa [#allocation3], 0
    // Predicated region
    $region2: #{tpu_custom_call.1} parent=1 // pred_check
      _
    $region3: #{tpu_custom_call.1} parent=1 // pred_check_branch
      %10 = sbr.rel (0) target = $region5
    $region4: #{tpu_custom_call.1} parent=1 // pred_region
      _
    $region5: #{tpu_custom_call.1} parent=1 // pred_fallthru
      _
    // Predicated region
    $region6: #{tpu_custom_call.1} parent=1 // pred_check
      _
    $region7: #{tpu_custom_call.1} parent=1 // pred_check_branch
      %12 = sbr.rel (0) target = $region9
    $region8: #{tpu_custom_call.1} parent=1 // pred_region
      _
    $region9: #{tpu_custom_call.1} parent=1 // pred_fallthru
      _
    // Predicated region
    $region10: #{tpu_custom_call.1} parent=1 // pred_check
      _
    $region11: #{tpu_custom_call.1} parent=1 // pred_check_branch
      %14 = sbr.rel (0) target = $region13
    $region12: #{tpu_custom_call.1} parent=1 // pred_region
      _
    $region13: #{tpu_custom_call.1} parent=1 // pred_fallthru
      _
    %v16 = vld [vmem:[%s0] sm:$0xff]
    %v17 = vld [vmem:[%s1] sm:$0xf]
    %v18 = vld [vmem:[%s1 + $0x4] sm:$0xf]
    %v19 = vld [vmem:[%s1 + $0x8] sm:$0xf]
    %v20 = vld [vmem:[%s1 + $0xc] sm:$0xf]
    %v21 = vld [vmem:[%s1 + $0x10] sm:$0xf]
    %v22 = vld [vmem:[%s1 + $0x14] sm:$0xf]
    %v23 = vld [vmem:[%s1 + $0x18] sm:$0xf]
    %v24 = vld [vmem:[%s1 + $0x1c] sm:$0xf]
    %v25 = vld [vmem:[%s1 + $0x20] sm:$0xf]
    %v26 = vld [vmem:[%s1 + $0x24] sm:$0xf]
    %v27 = vld [vmem:[%s1 + $0x28] sm:$0xf]
    %v28 = vld [vmem:[%s1 + $0x2c] sm:$0xf]
    %v29 = vld [vmem:[%s1 + $0x30] sm:$0xf]
    %v30 = vld [vmem:[%s1 + $0x34] sm:$0xf]
    %v31 = vld [vmem:[%s1 + $0x38] sm:$0xf]
    %v32 = vld [vmem:[%s1 + $0x3c] sm:$0xf]
    %v33 = vld [vmem:[%s1 + $0x40] sm:$0xf]
    %v34 = vld [vmem:[%s1 + $0x44] sm:$0xf]
    %v35 = vld [vmem:[%s1 + $0x48] sm:$0xf]
    %v36 = vld [vmem:[%s1 + $0x4c] sm:$0xf]
    %v37 = vld [vmem:[%s1 + $0x50] sm:$0xf]
    %v38 = vld [vmem:[%s1 + $0x54] sm:$0xf]
    %v39 = vld [vmem:[%s1 + $0x58] sm:$0xf]
    %v40 = vld [vmem:[%s1 + $0x5c] sm:$0xf]
    %v41 = vld [vmem:[%s2] sm:$0x1]
    %v43 = vlaneseq
    %v44 = vshrl.u32 %v43, 7
    %v45 = vsub.s32 0, %v44
    %v46 = vrot.slane %v41, %v45
    %v49 = vunpack.c.l.b16 %v16
    %v50 = vunpack.c.h.b16 %v16
    %v51 = vpack.c.b16 %v49, %v49
    %v52 = vpack.c.b16 %v50, %v50
    %v78 = vunpack.c.l.b16 %v17
    %v79 = vunpack.c.l.b16 %v18
    %v80 = vunpack.c.l.b16 %v19
    %v81 = vunpack.c.l.b16 %v20
    %v82 = vunpack.c.l.b16 %v21
    %v83 = vunpack.c.l.b16 %v22
    %v84 = vunpack.c.l.b16 %v23
    %v85 = vunpack.c.l.b16 %v24
    %v86 = vunpack.c.l.b16 %v25
    %v87 = vunpack.c.l.b16 %v26
    %v88 = vunpack.c.l.b16 %v27
    %v89 = vunpack.c.l.b16 %v28
    %v90 = vunpack.c.l.b16 %v29
    %v91 = vunpack.c.l.b16 %v30
    %v92 = vunpack.c.l.b16 %v31
    %v93 = vunpack.c.l.b16 %v32
    %v94 = vunpack.c.l.b16 %v33
    %v95 = vunpack.c.l.b16 %v34
    %v96 = vunpack.c.l.b16 %v35
    %v97 = vunpack.c.l.b16 %v36
    %v98 = vunpack.c.l.b16 %v37
    %v99 = vunpack.c.l.b16 %v38
    %v100 = vunpack.c.l.b16 %v39
    %v101 = vunpack.c.l.b16 %v40
    %v102 = vpack.c.b16 %v79, %v78
    %v103 = vpack.c.b16 %v81, %v80
    %v104 = vpack.c.b16 %v83, %v82
    %v105 = vpack.c.b16 %v85, %v84
    %v106 = vpack.c.b16 %v87, %v86
    %v107 = vpack.c.b16 %v89, %v88
    %v108 = vpack.c.b16 %v91, %v90
    %v109 = vpack.c.b16 %v93, %v92
    %v110 = vpack.c.b16 %v95, %v94
    %v111 = vpack.c.b16 %v97, %v96
    %v112 = vpack.c.b16 %v99, %v98
    %v113 = vpack.c.b16 %v101, %v100
    %vm126 = vcmask 523264
    %v128 = vsel %vm126, %v52, 0
    %130 = vmatprep.subr.bf16.mxu0 0
    %131 = vmatpush1.bf16.msra.mxu0 %v102
    %132 = vmatprep.subr.bf16.mxu0 0
    %133 = vmatpush1.bf16.msra.mxu0 %v103
    %134 = vmatprep.subr.bf16.mxu0 0
    %135 = vmatpush1.bf16.msra.mxu0 %v104
    %136 = vmatprep.subr.bf16.mxu0 0
    %137 = vmatpush1.bf16.msra.mxu0 %v105
    %138 = vmatprep.subr.bf16.mxu0 0
    %139 = vmatpush1.bf16.msra.mxu0 %v106
    %140 = vmatprep.subr.bf16.mxu0 0
    %141 = vmatpush1.bf16.msra.mxu0 %v107
    %142 = vmatprep.subr.bf16.mxu0 0
    %143 = vmatpush1.bf16.msra.mxu0 %v108
    %144 = vmatprep.subr.bf16.mxu0 0
    %145 = vmatpush1.bf16.msra.mxu0 %v109
    %146 = vmatprep.subr.bf16.mxu0 0
    %147 = vmatpush1.bf16.msra.mxu0 %v110
    %148 = vmatprep.subr.bf16.mxu0 0
    %149 = vmatpush1.bf16.msra.mxu0 %v111
    %150 = vmatprep.subr.bf16.mxu0 0
    %151 = vmatpush1.bf16.msra.mxu0 %v112
    %152 = vmatprep.subr.bf16.mxu0 0
    %153 = vmatpush1.bf16.msra.mxu0 %v113
    %154 = vmatprep.subr.bf16.mxu0 0
    %155 = vmatpush1.bf16.msra.mxu0 0
    %156 = vmatprep.subr.bf16.mxu0 0
    %157 = vmatpush1.bf16.msra.mxu0 0
    %158 = vmatprep.subr.bf16.mxu0 0
    %159 = vmatpush1.bf16.msra.mxu0 0
    %160 = vmatprep.subr.bf16.mxu0 0
    %161 = vmatpush1.bf16.msra.mxu0 0
    %162 = vmatprep.mubr.bf16.mxu0 %v128
    %163 = vmatmul.mubr.bf16.gmra.mrb[0].mxu0 %v51
    %v164 = vpop.f32.mrb[0].mxu0
    %v165 = vadd.f32 %v46, %v164
    %v166 = vpop.f32.mrb[0].mxu0
    %v167 = vpop.f32.mrb[0].mxu0
    %v168 = vpop.f32.mrb[0].mxu0
    %169 = vdwg.mxu0
    %vm170 = vcmask 261120
    %171 = vst.msk [vmem:[#allocation2] sm:$0xff] %vm170, %v165
    // Predicated region
    $region14: #{tpu_custom_call.1} parent=1 // pred_check
      _
    $region15: #{tpu_custom_call.1} parent=1 // pred_check_branch
      %173 = sbr.rel (0) target = $region17
    $region16: #{tpu_custom_call.1} parent=1 // pred_region
      %s175 = ssub.s32 128, 128
      %176 = vsyncadd [#allocation3], %s175
      %s178 = sshll.u32 [#allocation2], 4
      %s179 = int_to_ptr.vmem [resolvable:$true] %s178
      %181 = dma.vmem_to_hbm [thread:$0]  %s179, 128, %s3, [#allocation3]
    $region17: #{tpu_custom_call.1} parent=1 // pred_fallthru
      _
    // Predicated region
    $region18: #{tpu_custom_call.1} parent=1 // pred_check
      _
    $region19: #{tpu_custom_call.1} parent=1 // pred_check_branch
      %183 = sbr.rel (0) target = $region21
    $region20: #{tpu_custom_call.1} parent=1 // pred_region
      %184 = dma.done [#allocation3], 128
    $region21: #{tpu_custom_call.1} parent=1 // pred_fallthru
      _
    %185 = vsyncpa [#allocation3], 1

</llo_original>
